<compile_context>
chip_gen: v5e
topology: v5e:2x2
jax: 0.10.0
libtpu: 0.0.40
codegen_flags: <defaults>
</compile_context>

<pallas_src>
import functools

import jax
import jax.numpy as jnp
from jax.experimental import pallas as pl
from jax.experimental.pallas import tpu as pltpu

PATCH = 4          # synthetic patch size (downsample factor of the depth net)
HIDDEN = 32        # synthetic hidden width of the patch MLP
SCALING = 0.1      # conf.get('scaling', 0.1)

IMAGENET_MEAN = jnp.array([0.485, 0.456, 0.406], dtype=jnp.float32)
IMAGENET_STD = jnp.array([0.229, 0.224, 0.225], dtype=jnp.float32)

_VMEM_LIMIT = 32 * 1024 * 1024   # safe on v5e/v6e/v7x, above all scoped defaults


# ---------------------------------------------------------------------------
# Kernel 1: (normalization-folded) patch embedding + MLP head
#   input  xT : (K, M) bf16 patch features, M = n*hs*ws on the lane axis
#   output    : (1, M) f32 strictly positive per-patch depth (lane-dense)
# ---------------------------------------------------------------------------
def _patch_depth_kernel(xT_ref, w1t_ref, b1_ref, w2_ref, b2_ref, o_ref):
    # (hidden, K)bf16 @ (K, TILE_M)bf16 -> f32 acc: native MXU path.
    # Normalization is already folded into w1t/b1 in the wrapper.
    h = jnp.dot(w1t_ref[...], xT_ref[...], preferred_element_type=jnp.float32)
    h = jnp.maximum(h + b1_ref[...], 0.0)                     # ReLU, lane bcast
    # Second layer (hidden -> 1) as a sublane reduction; stays lane-dense.
    # (Review: MXU/VPU/XLU work here is free filler under the DMA bottleneck.)
    z = jnp.sum(h * w2_ref[...], axis=0, keepdims=True) + b2_ref[...]
    # Numerically stable softplus -> strictly positive depth.
    sp = jnp.maximum(z, 0.0) + jnp.log1p(jnp.exp(-jnp.abs(z)))
    o_ref[...] = sp + 1e-3


def _patch_depth(xT, w1t, b1, w2, b2, tile_m=32768):
    K, M = xT.shape
    hidden = w1t.shape[0]
    tile_m = min(tile_m, M)
    grid = (pl.cdiv(M, tile_m),)
    return pl.pallas_call(
        _patch_depth_kernel,
        out_shape=jax.ShapeDtypeStruct((1, M), jnp.float32),
        grid=grid,
        in_specs=[
            pl.BlockSpec((K, tile_m), lambda i: (0, i)),       # streamed bf16 input
            pl.BlockSpec((hidden, K), lambda i: (0, 0)),       # resident weights
            pl.BlockSpec((hidden, 1), lambda i: (0, 0)),
            pl.BlockSpec((hidden, 1), lambda i: (0, 0)),
            pl.BlockSpec((1, 1), lambda i: (0, 0)),
        ],
        out_specs=pl.BlockSpec((1, tile_m), lambda i: (0, i)),
        compiler_params=pltpu.CompilerParams(
            dimension_semantics=("parallel",),
            vmem_limit_bytes=_VMEM_LIMIT),
    )(xT, w1t, b1, w2, b2)


# ---------------------------------------------------------------------------
# Kernel 2: bilinear upsample (two matmuls) + (folded) scaling + reciprocal
#   grid = (n, W-tiles, H-tiles); H-tile innermost, 'arbitrary'
#   Full f32 path + exact reciprocal (writeback-bound, precision is free).
# ---------------------------------------------------------------------------
def _upsample_invert_kernel(th, d_ref, awt_ref, ah_ref, o_ref, tmp_ref):
    # tmp = depth_small @ a_w_t[:, w_tile]: once per (batch, W-tile) (and with
    # tile_w == W, once per batch), reused across all H-tiles.
    @pl.when(pl.program_id(2) == 0)
    def _():
        tmp_ref[...] = jnp.dot(d_ref[0], awt_ref[...],
                               preferred_element_type=jnp.float32)

    # a_h is fully resident (constant index_map); slice the th rows we need.
    row0 = pl.multiple_of(pl.program_id(2) * th, th)
    a_h = ah_ref[pl.ds(row0, th), :]
    # (TH, hs) @ (hs, TW) -> (TH, TW); SCALING already folded into a_h.
    up = jnp.dot(a_h, tmp_ref[...], preferred_element_type=jnp.float32)
    o_ref[0, 0] = 1.0 / up                      # exact reciprocal (parity)


def _largest_divisor_leq(n, cap):
    cap = max(1, min(cap, n))
    for t in range(cap, 0, -1):
        if n % t == 0:
            return t
    return 1


def _upsample_invert(depth_small, a_h, a_w_t, tile_h=512, tile_w=2048):
    n, hs, ws = depth_small.shape
    H = a_h.shape[0]
    W = a_w_t.shape[1]
    # Exact tiling (divisors) so the in-kernel pl.ds slice of the resident a_h
    # never reads out of bounds; W tile defaults to the full row (lane-dense,
    # contiguous writeback), capped for very large W to stay inside VMEM.
    th = _largest_divisor_leq(H, tile_h)
    tw = W if W <= tile_w else _largest_divisor_leq(W, tile_w)
    grid = (n, W // tw, H // th)
    kernel = functools.partial(_upsample_invert_kernel, th)
    return pl.pallas_call(
        kernel,
        out_shape=jax.ShapeDtypeStruct((n, 1, H, W), jnp.float32),
        grid=grid,
        in_specs=[
            pl.BlockSpec((1, hs, ws), lambda b, wi, hi: (b, 0, 0)),
            pl.BlockSpec((ws, tw), lambda b, wi, hi: (0, wi)),
            pl.BlockSpec((H, hs), lambda b, wi, hi: (0, 0)),   # resident a_h
        ],
        out_specs=pl.BlockSpec((1, 1, th, tw),
                               lambda b, wi, hi: (b, 0, hi, wi)),
        scratch_shapes=[pltpu.VMEM((hs, tw), jnp.float32)],
        compiler_params=pltpu.CompilerParams(
            dimension_semantics=("parallel", "parallel", "arbitrary"),
            vmem_limit_bytes=_VMEM_LIMIT),
    )(depth_small, a_w_t, a_h)


# ---------------------------------------------------------------------------
# Glue: interpolation matrices matching F.interpolate(..., mode='bilinear',
# align_corners=False)
# ---------------------------------------------------------------------------
def _bilinear_matrix(out_size, in_size):
    scale = in_size / out_size
    i = jnp.arange(out_size, dtype=jnp.float32)
    src = (i + 0.5) * scale - 0.5
    src = jnp.maximum(src, 0.0)                      # PyTorch clamps low end
    src0 = jnp.floor(src)
    frac = src - src0
    idx0 = jnp.clip(src0.astype(jnp.int32), 0, in_size - 1)
    idx1 = jnp.clip(src0.astype(jnp.int32) + 1, 0, in_size - 1)
    rows = jnp.arange(out_size)
    A = jnp.zeros((out_size, in_size), dtype=jnp.float32)
    A = A.at[rows, idx0].add(1.0 - frac)
    A = A.at[rows, idx1].add(frac)
    return A


def init_params(key, c=3, patch=PATCH, hidden=HIDDEN):
    k_in = c * patch * patch
    k1, k2, k3 = jax.random.split(key, 3)
    w1 = jax.random.normal(k1, (k_in, hidden), dtype=jnp.float32) * 0.1
    b1 = jax.random.normal(k2, (1, hidden), dtype=jnp.float32) * 0.01
    w2 = jax.random.normal(k3, (hidden, 1), dtype=jnp.float32) * 0.1
    b2 = jnp.full((1, 1), 0.5, dtype=jnp.float32)
    return dict(w1=w1, b1=b1, w2=w2, b2=b2)


def metric3d_forward(rgbs, params, return_features=False):
    """rgbs: (n, 3, H, W) float32, NCHW like PyTorch."""
    n, c, H, W = rgbs.shape
    p = PATCH
    hs, ws = H // p, W // p
    k_in = c * p * p

    # ViT-style patchify to (K, M) with the patch axis (M = n*hs*ws) last so
    # it lands on the TPU lane dimension; the bf16 cast fuses into the
    # transpose so the HBM stream fed to kernel 1 is halved.
    # TODO(synk): fold this patchify into kernel 1 by streaming rgbs
    # (1, c, rows*p, W) blocks and rearranging in VMEM, removing the extra
    # HBM round trip of the image entirely.
    x = rgbs.reshape(n, c, hs, p, ws, p)
    xT = (jnp.transpose(x, (1, 3, 5, 0, 2, 4))
          .reshape(k_in, n * hs * ws)
          .astype(jnp.bfloat16))

    # Fold ImageNet normalization into the first-layer weights:
    #   (x - mean)/std @ w1 + b1  ==  x @ (w1/std) + (b1 - (mean/std) @ w1)
    # The bias fold uses the bf16-rounded weights so it matches the kernel.
    mean_vec = jnp.repeat(IMAGENET_MEAN, p * p)               # (K,)
    std_vec = jnp.repeat(IMAGENET_STD, p * p)                 # (K,)
    w1t_f32 = (params["w1"] * (1.0 / std_vec)[:, None]).T     # (hidden, K)
    w1t_bf16 = w1t_f32.astype(jnp.bfloat16)
    b1_f = (params["b1"].reshape(-1, 1)
            - w1t_bf16.astype(jnp.float32) @ mean_vec[:, None])   # (hidden, 1)
    w2_col = params["w2"].reshape(-1, 1)                      # (hidden, 1)
    b2 = params["b2"].reshape(1, 1)

    # Kernel 1: patch depth prediction, tiled/pipelined over M.
    depth_flat = _patch_depth(xT, w1t_bf16, b1_f, w2_col, b2)  # (1, M)
    depth_small = depth_flat.reshape(n, hs, ws)

    # Kernel 2: bilinear upsample to (H, W) + scaling + invert (all f32).
    a_h = _bilinear_matrix(H, hs) * SCALING                    # (H, hs)
    a_w_t = _bilinear_matrix(W, ws).T                          # (ws, W)
    depth = _upsample_invert(depth_small, a_h, a_w_t)          # (n, 1, H, W)

    if not return_features:
        return [depth]
    else:
        # The reference wrapper returns zeros_like(depth) as "features".
        return [depth], jnp.zeros_like(depth)


if __name__ == "__main__":
    key = jax.random.PRNGKey(0)
    k_img, k_par = jax.random.split(key)

    n, c, H, W = 2, 3, 16, 16
    rgbs = jax.random.uniform(k_img, (n, c, H, W), dtype=jnp.float32)
    params = init_params(k_par, c=c)

    out = metric3d_forward(rgbs, params, return_features=True)
    depth = out[0][0]
    feats = out[1]
    jax.block_until_ready(depth)
    jax.block_until_ready(feats)

    assert depth.shape == (n, 1, H, W), depth.shape
    assert feats.shape == (n, 1, H, W), feats.shape
    assert bool(jnp.all(jnp.isfinite(depth)))
    assert bool(jnp.all(depth > 0.0))
    print("KERNEL_OK")
</pallas_src>

<mosaic_0001>
module attributes {stable_mosaic.version = 11 : i64} {
  func.func @_patch_depth_kernel(%arg0: i32, %arg1: memref<48x32xbf16, #tpu.memory_space<vmem>>, %arg2: memref<32x48xbf16, #tpu.memory_space<vmem>>, %arg3: memref<32x1xf32, #tpu.memory_space<vmem>>, %arg4: memref<32x1xf32, #tpu.memory_space<vmem>>, %arg5: memref<1x1xf32, #tpu.memory_space<vmem>>, %arg6: memref<1x32xf32, #tpu.memory_space<vmem>>) attributes {dimension_semantics = [#tpu.dimension_semantics<parallel>], iteration_bounds = array<i64: 1>, scalar_prefetch = 0 : i64, scratch_operands = 0 : i64, tpu.core_type = #tpu.core_type<tc>, window_params = [{transform_indices = @transform_0, window_bounds = array<i64: 48, 32>}, {pipeline_mode = #tpu.pipeline_mode<synchronous>, transform_indices = @transform_1, window_bounds = array<i64: 32, 48>}, {pipeline_mode = #tpu.pipeline_mode<synchronous>, transform_indices = @transform_2, window_bounds = array<i64: 32, 1>}, {pipeline_mode = #tpu.pipeline_mode<synchronous>, transform_indices = @transform_3, window_bounds = array<i64: 32, 1>}, {pipeline_mode = #tpu.pipeline_mode<synchronous>, transform_indices = @transform_4, window_bounds = array<i64: 1, 1>}, {transform_indices = @transform_5, window_bounds = array<i64: 1, 32>}]} {
    %c0 = arith.constant 0 : index
    %c0_0 = arith.constant 0 : index
    %0 = vector.load %arg2[%c0, %c0_0] : memref<32x48xbf16, #tpu.memory_space<vmem>>, vector<32x48xbf16>
    %c0_1 = arith.constant 0 : index
    %c0_2 = arith.constant 0 : index
    %1 = vector.load %arg1[%c0_1, %c0_2] : memref<48x32xbf16, #tpu.memory_space<vmem>>, vector<48x32xbf16>
    %cst = arith.constant dense<0.000000e+00> : vector<32x32xf32>
    %2 = tpu.matmul %0, %1, %cst {dimension_numbers = #tpu.dot_dimension_numbers<[1], [0], [0], [1], [0, 0, 1, 1], [], []>} : vector<32x48xbf16>, vector<48x32xbf16>, vector<32x32xf32> -> vector<32x32xf32>
    %c0_3 = arith.constant 0 : index
    %c0_4 = arith.constant 0 : index
    %3 = vector.load %arg3[%c0_3, %c0_4] : memref<32x1xf32, #tpu.memory_space<vmem>>, vector<32x1xf32>
    %4 = vector.broadcast %3 : vector<32x1xf32> to vector<32x32xf32>
    %5 = arith.addf %2, %4 : vector<32x32xf32>
    %cst_5 = arith.constant 0.000000e+00 : f32
    %6 = vector.broadcast %cst_5 : f32 to vector<32x32xf32>
    %7 = arith.maximumf %5, %6 : vector<32x32xf32>
    %c0_6 = arith.constant 0 : index
    %c0_7 = arith.constant 0 : index
    %8 = vector.load %arg4[%c0_6, %c0_7] : memref<32x1xf32, #tpu.memory_space<vmem>>, vector<32x1xf32>
    %9 = vector.broadcast %8 : vector<32x1xf32> to vector<32x32xf32>
    %10 = arith.mulf %7, %9 : vector<32x32xf32>
    %cst_8 = arith.constant dense<0.000000e+00> : vector<32xf32>
    %11 = vector.multi_reduction <add>, %10, %cst_8 [0] : vector<32x32xf32> to vector<32xf32>
    %12 = vector.shape_cast %11 : vector<32xf32> to vector<1x32xf32>
    %c0_9 = arith.constant 0 : index
    %c0_10 = arith.constant 0 : index
    %13 = vector.load %arg5[%c0_9, %c0_10] : memref<1x1xf32, #tpu.memory_space<vmem>>, vector<1x1xf32>
    %14 = vector.broadcast %13 : vector<1x1xf32> to vector<1x32xf32>
    %15 = arith.addf %12, %14 : vector<1x32xf32>
    %cst_11 = arith.constant 0.000000e+00 : f32
    %16 = vector.broadcast %cst_11 : f32 to vector<1x32xf32>
    %17 = arith.maximumf %15, %16 : vector<1x32xf32>
    %18 = math.absf %15 : vector<1x32xf32>
    %cst_12 = arith.constant 0.000000e+00 : f32
    %19 = vector.broadcast %cst_12 : f32 to vector<1x32xf32>
    %20 = arith.subf %19, %18 : vector<1x32xf32>
    %21 = math.exp %20 : vector<1x32xf32>
    %22 = math.log1p %21 : vector<1x32xf32>
    %23 = arith.addf %17, %22 : vector<1x32xf32>
    %cst_13 = arith.constant 1.000000e-03 : f32
    %24 = vector.broadcast %cst_13 : f32 to vector<1x32xf32>
    %25 = arith.addf %23, %24 : vector<1x32xf32>
    %c0_14 = arith.constant 0 : index
    %c0_15 = arith.constant 0 : index
    %26 = vector.load %arg6[%c0_14, %c0_15] : memref<1x32xf32, #tpu.memory_space<vmem>>, vector<1x32xf32>
    tpu.vector_store %arg6[%c0_14, %c0_15], %25 {strides = array<i32>} : memref<1x32xf32, #tpu.memory_space<vmem>>, vector<1x32xf32>,
    return
  }
  func.func @transform_0(%arg0: i32) -> (i32, i32) {
    %c0_i32 = arith.constant 0 : i32
    %c0_i32_0 = arith.constant 0 : i32
    return %c0_i32, %arg0 : i32, i32
  }
  func.func @transform_1(%arg0: i32) -> (i32, i32) {
    %c0_i32 = arith.constant 0 : i32
    %c0_i32_0 = arith.constant 0 : i32
    %c0_i32_1 = arith.constant 0 : i32
    return %c0_i32, %c0_i32_0 : i32, i32
  }
  func.func @transform_2(%arg0: i32) -> (i32, i32) {
    %c0_i32 = arith.constant 0 : i32
    %c0_i32_0 = arith.constant 0 : i32
    %c0_i32_1 = arith.constant 0 : i32
    return %c0_i32, %c0_i32_0 : i32, i32
  }
  func.func @transform_3(%arg0: i32) -> (i32, i32) {
    %c0_i32 = arith.constant 0 : i32
    %c0_i32_0 = arith.constant 0 : i32
    %c0_i32_1 = arith.constant 0 : i32
    return %c0_i32, %c0_i32_0 : i32, i32
  }
  func.func @transform_4(%arg0: i32) -> (i32, i32) {
    %c0_i32 = arith.constant 0 : i32
    %c0_i32_0 = arith.constant 0 : i32
    %c0_i32_1 = arith.constant 0 : i32
    return %c0_i32, %c0_i32_0 : i32, i32
  }
  func.func @transform_5(%arg0: i32) -> (i32, i32) {
    %c0_i32 = arith.constant 0 : i32
    %c0_i32_0 = arith.constant 0 : i32
    return %c0_i32, %arg0 : i32, i32
  }
}

</mosaic_0001>

<llo_original>
// kernel: tpu_custom_call.1
$region0: #{tpu_custom_call.1}
  #allocation0 [shape = 'u32[]', space=smem, size = 0x4, offset = 0x4, fixed_abs, tag = 'smem constant byte address 0x4 - core index']
  #allocation1 [shape = 'u32[72,128]{1,0:T(1,128)}', space=vmem, size = 0x9000, scoped, tag = 'internal scratch']
  #allocation2 [shape = 'f32[1,1]{1,0:T(1,128)S(1)}', space=vmem, size = 0x200, scoped, tag = 'scoped memory for tpu_custom_call.1']
  %s0 = inlined_call_operand.vmem [shape: bf16[48,32], index: 0, kind: input, shape index: {}]
  %s1 = inlined_call_operand.vmem [shape: bf16[32,48], index: 1, kind: input, shape index: {}]
  %s2 = inlined_call_operand.vmem [shape: f32[32,1], index: 2, kind: input, shape index: {}]
  %s3 = inlined_call_operand.vmem [shape: f32[32,1], index: 3, kind: input, shape index: {}]
  %s4 = inlined_call_operand.<no memory space> [shape: f32[1,1], index: 4, kind: input, shape index: {}]
  %s5 = inlined_call_operand.hbm [shape: f32[1,32], index: 5, kind: output, shape index: {}]
  %s6 = sld [smem:[#allocation0]]
  $region30: #{tpu_custom_call.1} parent=0
    _
  %s8 = ssub.s32 1, %s6
  %s9 = scalar_select 0, %s8, %s6
  %v10 = vstv %s4
  %11 = vst [vmem:[#allocation2] sm:$0x1] %v10
  $region1: #{tpu_custom_call.1} parent=0
    #allocation3 [shape = 'u8[512]{0}', space=vmem, size = 0x400, scoped, tag = 'output window, operand 0, single buffered']
    #allocation4 [shape = 's32[1]{0}', space=sflag, size = 0x4, scoped, tag = 'scoped memory for tpu_custom_call.1']
    %12 = vsyncpa [#allocation4], 0
    // Predicated region
    $region2: #{tpu_custom_call.1} parent=1 // pred_check
      _
    $region3: #{tpu_custom_call.1} parent=1 // pred_check_branch
      %14 = sbr.rel (0) target = $region5
    $region4: #{tpu_custom_call.1} parent=1 // pred_region
      _
    $region5: #{tpu_custom_call.1} parent=1 // pred_fallthru
      _
    // Predicated region
    $region6: #{tpu_custom_call.1} parent=1 // pred_check
      _
    $region7: #{tpu_custom_call.1} parent=1 // pred_check_branch
      %16 = sbr.rel (0) target = $region9
    $region8: #{tpu_custom_call.1} parent=1 // pred_region
      _
    $region9: #{tpu_custom_call.1} parent=1 // pred_fallthru
      _
    // Predicated region
    $region10: #{tpu_custom_call.1} parent=1 // pred_check
      _
    $region11: #{tpu_custom_call.1} parent=1 // pred_check_branch
      %18 = sbr.rel (0) target = $region13
    $region12: #{tpu_custom_call.1} parent=1 // pred_region
      _
    $region13: #{tpu_custom_call.1} parent=1 // pred_fallthru
      _
    // Predicated region
    $region14: #{tpu_custom_call.1} parent=1 // pred_check
      _
    $region15: #{tpu_custom_call.1} parent=1 // pred_check_branch
      %20 = sbr.rel (0) target = $region17
    $region16: #{tpu_custom_call.1} parent=1 // pred_region
      _
    $region17: #{tpu_custom_call.1} parent=1 // pred_fallthru
      _
    // Predicated region
    $region18: #{tpu_custom_call.1} parent=1 // pred_check
      _
    $region19: #{tpu_custom_call.1} parent=1 // pred_check_branch
      %22 = sbr.rel (0) target = $region21
    $region20: #{tpu_custom_call.1} parent=1 // pred_region
      _
    $region21: #{tpu_custom_call.1} parent=1 // pred_fallthru
      _
    %v24 = vld [vmem:[%s1] sm:$0xf]
    %v25 = vld [vmem:[%s1 + $0x4] sm:$0xf]
    %v26 = vld [vmem:[%s1 + $0x8] sm:$0xf]
    %v27 = vld [vmem:[%s1 + $0xc] sm:$0xf]
    %v28 = vld [vmem:[%s0] sm:$0xf]
    %v29 = vld [vmem:[%s0 + $0x4] sm:$0xf]
    %v30 = vld [vmem:[%s0 + $0x8] sm:$0xf]
    %v31 = vld [vmem:[%s0 + $0xc] sm:$0xf]
    %v32 = vld [vmem:[%s0 + $0x10] sm:$0xf]
    %v33 = vld [vmem:[%s0 + $0x14] sm:$0xf]
    %v34 = vld [vmem:[%s2] sm:$0xff]
    %v35 = vld [vmem:[%s2 + $0x8] sm:$0xff]
    %v36 = vld [vmem:[%s2 + $0x10] sm:$0xff]
    %v37 = vld [vmem:[%s2 + $0x18] sm:$0xff]
    %39 = vset.pattern.permute.xlu0 0
    %40 = vperm.xlu0 %39, %v34
    %v41 = vpop.permute.xlu0 %40
    %44 = vset.pattern.permute.xlu0 0
    %45 = vperm.xlu0 %44, %v35
    %v46 = vpop.permute.xlu0 %45
    %49 = vset.pattern.permute.xlu0 0
    %50 = vperm.xlu0 %49, %v36
    %v51 = vpop.permute.xlu0 %50
    %54 = vset.pattern.permute.xlu0 0
    %55 = vperm.xlu0 %54, %v37
    %v56 = vpop.permute.xlu0 %55
    %v62 = vunpack.c.l.b16 %v24
    %v63 = vunpack.c.l.b16 %v25
    %v64 = vunpack.c.l.b16 %v26
    %v65 = vunpack.c.l.b16 %v27
    %v66 = vpack.c.b16 %v63, %v62
    %v67 = vpack.c.b16 %v65, %v64
    %v74 = vunpack.c.l.b16 %v28
    %v75 = vunpack.c.l.b16 %v29
    %v76 = vunpack.c.l.b16 %v30
    %v77 = vunpack.c.l.b16 %v31
    %v78 = vunpack.c.l.b16 %v32
    %v79 = vunpack.c.l.b16 %v33
    %v80 = vpack.c.b16 %v75, %v74
    %v81 = vpack.c.b16 %v77, %v76
    %v82 = vpack.c.b16 %v79, %v78
    %vm86 = vcmask 392192
    %v88 = vsel %vm86, %v66, 0
    %v91 = vsel %vm86, %v67, 0
    %93 = vmatpush.bf16.msra.mxu0 0
    %94 = vmatpush.bf16.msra.mxu0 0
    %95 = vmatpush.bf16.msra.mxu0 0
    %96 = vmatpush.bf16.msra.mxu0 0
    %97 = vmatpush.bf16.msra.mxu0 0
    %98 = vmatpush.bf16.msra.mxu0 %v82
    %99 = vmatpush.bf16.msra.mxu0 %v81
    %100 = vmatpush.bf16.msra.mxu0 %v80
    %101 = vmatmul.bf16.gmra.mxu0 %v88
    %v102 = vpop.f32.mrf.mxu0
    %v103 = vadd.f32 %v41, %v102
    %v104 = vpop.f32.mrf.mxu0
    %v105 = vadd.f32 %v46, %v104
    %106 = vmatmul.bf16.gmra.mxu0 %v91
    %v107 = vpop.f32.mrf.mxu0
    %v108 = vadd.f32 %v51, %v107
    %v109 = vpop.f32.mrf.mxu0
    %v110 = vadd.f32 %v56, %v109
    %111 = vdwg.mxu0
    %v112 = vmax.f32 %v103, 0.0
    %v113 = vmax.f32 %v105, 0.0
    %v114 = vmax.f32 %v108, 0.0
    %v115 = vmax.f32 %v110, 0.0
    %v116 = vld [vmem:[%s3] sm:$0xff]
    %v117 = vld [vmem:[%s3 + $0x8] sm:$0xff]
    %v118 = vld [vmem:[%s3 + $0x10] sm:$0xff]
    %v119 = vld [vmem:[%s3 + $0x18] sm:$0xff]
    %121 = vset.pattern.permute.xlu0 0
    %122 = vperm.xlu0 %121, %v116
    %v123 = vpop.permute.xlu0 %122
    %126 = vset.pattern.permute.xlu0 0
    %127 = vperm.xlu0 %126, %v117
    %v128 = vpop.permute.xlu0 %127
    %131 = vset.pattern.permute.xlu0 0
    %132 = vperm.xlu0 %131, %v118
    %v133 = vpop.permute.xlu0 %132
    %136 = vset.pattern.permute.xlu0 0
    %137 = vperm.xlu0 %136, %v119
    %v138 = vpop.permute.xlu0 %137
    %v140 = vmul.f32 %v112, %v123
    %v141 = vmul.f32 %v113, %v128
    %v142 = vmul.f32 %v114, %v133
    %v143 = vmul.f32 %v115, %v138
    %vm144 = vcmask 261120
    %v145 = vsel %vm144, %v140, 0.0
    %v146 = vsel %vm144, %v141, 0.0
    %v147 = vadd.f32 %v145, %v146
    %v148 = vsel %vm144, %v142, 0.0
    %v149 = vadd.f32 %v147, %v148
    %v150 = vsel %vm144, %v143, 0.0
    %v151 = vadd.f32 %v149, %v150
    %v152 = vrot.slane %v151, 4
    %v153 = vadd.f32 %v151, %v152
    %v154 = vrot.slane %v153, 2
    %v155 = vadd.f32 %v153, %v154
    %v156 = vrot.slane %v155, 1
    %v157 = vadd.f32 %v155, %v156
    %v158 = vld [vmem:[#allocation2] sm:$0x1]
    %160 = vset.pattern.permute.xlu0 0
    %161 = vperm.xlu0 %160, %v158
    %v162 = vpop.permute.xlu0 %161
    %v164 = vperm.slane %v162, 0
    %v165 = vadd.f32 %v157, %v164
    %v166 = vmax.f32 %v165, 0.0
    %v167 = vand.u32 2147483647, %v165
    %v168 = vsub.f32 0.0, %v167
    %v169 = vmul.f32 %v168, 1.442695
    %v170 = vpow.pop %v169
    %v171 = vadd.f32 %v170, 1.0
    %v172 = vlog2.pop %v171
    %v173 = vmul.f32 %v172, 0.6931472
    %v174 = vmul.f32 -0.5, %v170
    %v175 = vadd.f32 %v174, 1.0
    %v176 = vmul.f32 %v175, %v170
    %v177 = vand.u32 2147483647, %v170
    %vm178 = vcmp.lt.f32.partialorder %v177, 0.0004427343
    %v179 = vsel %vm178, %v176, %v173
    %v180 = vadd.f32 %v166, %v179
    %v181 = vadd.f32 %v180, 0.001
    %vm182 = vcmask 253952
    %183 = vst.msk [vmem:[#allocation3] sm:$0x1] %vm182, %v181
    // Predicated region
    $region22: #{tpu_custom_call.1} parent=1 // pred_check
      _
    $region23: #{tpu_custom_call.1} parent=1 // pred_check_branch
      %185 = sbr.rel (0) target = $region25
    $region24: #{tpu_custom_call.1} parent=1 // pred_region
      %187 = vsyncadd [#allocation4], 0
      %s189 = sshll.u32 [#allocation3], 4
      %s190 = int_to_ptr.vmem [resolvable:$true] %s189
      %s191 = sshll.u32 %s5, 4
      %s192 = int_to_ptr.hbm [resolvable:$true] %s191
      %194 = dma.vmem_to_hbm [thread:$0]  %s190, 16, %s192, [#allocation4]
    $region25: #{tpu_custom_call.1} parent=1 // pred_fallthru
      _
    // Predicated region
    $region26: #{tpu_custom_call.1} parent=1 // pred_check
      _
    $region27: #{tpu_custom_call.1} parent=1 // pred_check_branch
      %196 = sbr.rel (0) target = $region29
    $region28: #{tpu_custom_call.1} parent=1 // pred_region
      %198 = dma.done [#allocation4], 16
    $region29: #{tpu_custom_call.1} parent=1 // pred_fallthru
      _
    %199 = vsyncpa [#allocation4], 1

</llo_original>
